<compile_context>
chip_gen: v7x
topology: tpu7x:2x2x1
jax: 0.10.0
libtpu: 0.0.40
codegen_flags: <defaults>
</compile_context>

<pallas_src>
import jax
import jax.numpy as jnp
from jax.experimental import pallas as pl
from jax.experimental.pallas import tpu as pltpu

LANE = 128
_MAX_BLOCK_BYTES = 8 << 20   # per-block DMA cap so the VMEM budget fits v7x


def _hardswish_kernel(x_ref, o_ref):
    x = x_ref[...].astype(jnp.float32)
    # relu6(x + 3) = clamp(x + 3, 0, 6); multiply by 1/6 instead of dividing.
    r6 = jnp.clip(x + 3.0, 0.0, 6.0)
    o_ref[...] = (x * r6 * (1.0 / 6.0)).astype(o_ref.dtype)


def _hardswish_jnp(x):
    xf = x.astype(jnp.float32)
    return (xf * jnp.clip(xf + 3.0, 0.0, 6.0) * (1.0 / 6.0)).astype(x.dtype)


def _sublane_min(dtype) -> int:
    """Minimum sublane tile (second-minor dim) for the dtype's packing."""
    itemsize = jnp.dtype(dtype).itemsize
    return {4: 8, 2: 16, 1: 32}.get(itemsize, 8)


def _build_call(x2d: jax.Array, tile_rows: int, inplace: bool, n_in_bufs: int):
    rows, lane = x2d.shape
    itemsize = jnp.dtype(x2d.dtype).itemsize
    grid = (pl.cdiv(rows, tile_rows),)  # uneven last block is fine (clipped)

    idx = lambda i: (i, 0)
    if n_in_bufs > 2 and hasattr(pl, "Buffered"):
        in_spec = pl.BlockSpec((tile_rows, lane), idx,
                               pipeline_mode=pl.Buffered(n_in_bufs))
    else:
        n_in_bufs = 2
        in_spec = pl.BlockSpec((tile_rows, lane), idx)

    block_bytes = tile_rows * lane * itemsize
    # pipeline-resident blocks + 2 MiB slack; floor keeps small inputs happy,
    # cap stays well under v7x's 64 MiB physical VMEM (v5e/v6e: 128 MiB).
    out_bufs = 2
    vmem_budget = (n_in_bufs + out_bufs) * block_bytes + (2 << 20)
    vmem_budget = min(max(vmem_budget, 16 << 20), 48 << 20)

    n_elem = rows * lane
    cost = pl.CostEstimate(flops=5 * n_elem,
                           transcendentals=0,
                           bytes_accessed=2 * n_elem * itemsize)

    return pl.pallas_call(
        _hardswish_kernel,
        out_shape=jax.ShapeDtypeStruct((rows, lane), x2d.dtype),
        grid_spec=pltpu.PrefetchScalarGridSpec(
            num_scalar_prefetch=0,
            grid=grid,
            in_specs=[in_spec],
            out_specs=pl.BlockSpec((tile_rows, lane), idx),
        ),
        compiler_params=pltpu.CompilerParams(
            # TODO(synk): try pltpu.CORE_PARALLEL and confirm in an xprof trace
            # that both v7x TensorCores stream (HBM BW is per-TC on v7x).
            dimension_semantics=(pltpu.PARALLEL,),
            vmem_limit_bytes=vmem_budget,
        ),
        cost_estimate=cost,
        input_output_aliases=({0: 0} if inplace else {}),
    )


def _hardswish_2d(x2d: jax.Array, tile_rows: int, inplace: bool) -> jax.Array:
    # Prefer a triple-buffered input pipeline; fall back to the default
    # double-buffering if the installed JAX does not support pl.Buffered here.
    last_err = None
    for n_in_bufs in (3, 2):
        try:
            return _build_call(x2d, tile_rows, inplace, n_in_bufs)(x2d)
        except Exception as e:  # pragma: no cover - fallback path
            last_err = e
    raise last_err


def hardswish(x: jax.Array, *, target_block_bytes: int = 4 << 20,
              inplace: bool = False) -> jax.Array:
    """HardSwish applied elementwise. Any shape; NCHW activations expected."""
    if not jnp.issubdtype(x.dtype, jnp.floating):
        raise TypeError(f"hardswish expects a floating dtype, got {x.dtype}")

    orig_shape = x.shape
    n_elem = x.size
    if n_elem == 0:
        return x

    itemsize = jnp.dtype(x.dtype).itemsize
    sub_min = _sublane_min(x.dtype)
    target = min(max(target_block_bytes, LANE * itemsize * sub_min),
                 _MAX_BLOCK_BYTES)

    def run2d(x2d):
        rows = x2d.shape[0]
        tile_rows = max(target // (LANE * itemsize), sub_min)
        tile_rows = (tile_rows // sub_min) * sub_min
        if tile_rows >= rows:
            tile_rows = rows  # block == full array dim -> always legal
        return _hardswish_2d(x2d, tile_rows, inplace)

    main = (n_elem // LANE) * LANE
    if main == n_elem:
        # Fast path: no pad, no slice; reshape of a contiguous array is free.
        return run2d(x.reshape(n_elem // LANE, LANE)).reshape(orig_shape)

    # Rare ragged tail (< 128 elements): kernel handles the lane-aligned
    # prefix, plain jnp handles the tiny remainder (avoids a full extra HBM
    # pad + slice pass over the whole tensor).
    x_flat = jnp.ravel(x)
    if main == 0:
        return _hardswish_jnp(x_flat).reshape(orig_shape)
    head = run2d(x_flat[:main].reshape(main // LANE, LANE)).reshape(-1)
    tail = _hardswish_jnp(x_flat[main:])
    return jnp.concatenate([head, tail]).reshape(orig_shape)


def hardswish_ref(x):
    return x * jnp.clip(x + 3.0, 0.0, 6.0) / 6.0


if __name__ == "__main__":
    key = jax.random.PRNGKey(0)
    # NCHW input, small shape consistent with MobileNetV3 activations.
    x = jax.random.normal(key, (2, 4, 16, 16), dtype=jnp.float32) * 4.0

    y = hardswish(x)
    jax.block_until_ready(y)

    y_ref = hardswish_ref(x)
    assert y.shape == x.shape and y.dtype == x.dtype
    assert jnp.allclose(y, y_ref, atol=1e-6, rtol=1e-6), "mismatch vs reference"

    print("KERNEL_OK")
</pallas_src>

<mosaic_0001>
module attributes {stable_mosaic.version = 11 : i64} {
  func.func @_hardswish_kernel(%arg0: i32, %arg1: memref<16x128xf32, #tpu.memory_space<vmem>>, %arg2: memref<16x128xf32, #tpu.memory_space<vmem>>) attributes {dimension_semantics = [#tpu.dimension_semantics<parallel>], iteration_bounds = array<i64: 1>, scalar_prefetch = 0 : i64, scratch_operands = 0 : i64, tpu.core_type = #tpu.core_type<tc>, window_params = [{transform_indices = @transform_0, window_bounds = array<i64: 16, 128>}, {transform_indices = @transform_1, window_bounds = array<i64: 16, 128>}]} {
    %c0 = arith.constant 0 : index
    %c0_0 = arith.constant 0 : index
    %0 = vector.load %arg1[%c0, %c0_0] : memref<16x128xf32, #tpu.memory_space<vmem>>, vector<16x128xf32>
    %cst = arith.constant 3.000000e+00 : f32
    %1 = vector.broadcast %cst : f32 to vector<16x128xf32>
    %2 = arith.addf %0, %1 : vector<16x128xf32>
    %cst_1 = arith.constant 0.000000e+00 : f32
    %cst_2 = arith.constant 6.000000e+00 : f32
    %3 = vector.broadcast %cst_1 : f32 to vector<16x128xf32>
    %4 = arith.maximumf %3, %2 : vector<16x128xf32>
    %5 = vector.broadcast %cst_2 : f32 to vector<16x128xf32>
    %6 = arith.minimumf %5, %4 : vector<16x128xf32>
    %7 = arith.mulf %0, %6 : vector<16x128xf32>
    %cst_3 = arith.constant 0.166666672 : f32
    %8 = vector.broadcast %cst_3 : f32 to vector<16x128xf32>
    %9 = arith.mulf %7, %8 : vector<16x128xf32>
    %c0_4 = arith.constant 0 : index
    %c0_5 = arith.constant 0 : index
    %10 = vector.load %arg2[%c0_4, %c0_5] : memref<16x128xf32, #tpu.memory_space<vmem>>, vector<16x128xf32>
    tpu.vector_store %arg2[%c0_4, %c0_5], %9 {strides = array<i32>} : memref<16x128xf32, #tpu.memory_space<vmem>>, vector<16x128xf32>,
    return
  }
  func.func @transform_0(%arg0: i32) -> (i32, i32) {
    %c0_i32 = arith.constant 0 : i32
    %c0_i32_0 = arith.constant 0 : i32
    return %arg0, %c0_i32 : i32, i32
  }
  func.func @transform_1(%arg0: i32) -> (i32, i32) {
    %c0_i32 = arith.constant 0 : i32
    %c0_i32_0 = arith.constant 0 : i32
    return %arg0, %c0_i32 : i32, i32
  }
}

</mosaic_0001>

<llo_original>
// kernel: tpu_custom_call.1
$region0: #{tpu_custom_call.1}
  #allocation0 [shape = 'u32[]', space=smem, size = 0x4, offset = 0x4, fixed_abs, tag = 'smem constant byte address 0x4 - core index']
  #allocation1 [shape = 'u32[144,128]{1,0:T(1,128)}', space=vmem, size = 0x12000, scoped, tag = 'internal scratch']
  %s0 = inlined_call_operand.hbm [shape: f32[16,128], index: 0, kind: input, shape index: {}]
  %s1 = inlined_call_operand.hbm [shape: f32[16,128], index: 1, kind: output, shape index: {}]
  %s2 = sld [smem:[#allocation0]]
  $region18: #{tpu_custom_call.1} parent=0
    _
  %s4 = ssub.s32 1, %s2
  %s5 = scalar_select 0, %s4, %s2
  $region1: #{tpu_custom_call.1} parent=0
    #allocation2 [shape = 'u8[8192]{0}', space=vmem, size = 0x2000, scoped, tag = 'input window, operand 0, single buffered']
    #allocation3 [shape = 's32[1]{0}', space=sflag, size = 0x4, scoped, tag = 'scoped memory for tpu_custom_call.1']
    #allocation4 [shape = 's32[1]{0}', space=sflag, size = 0x4, scoped, tag = 'scoped memory for tpu_custom_call.1']
    #allocation5 [shape = 'u8[8192]{0}', space=vmem, size = 0x2000, scoped, tag = 'output window, operand 0, single buffered']
    %6 = vsyncpa [#allocation3], 0
    %7 = vsyncpa [#allocation4], 0
    // Predicated region
    $region2: #{tpu_custom_call.1} parent=1 // pred_check
      _
    $region3: #{tpu_custom_call.1} parent=1 // pred_check_branch
      %9 = sbr.rel (0) target = $region5
    $region4: #{tpu_custom_call.1} parent=1 // pred_region
      %s11 = ssub.s32 256, 256
      %12 = vsyncadd [#allocation3], %s11
      %s13 = sshll.u32 [#allocation2], 4
      %s14 = int_to_ptr.vmem [resolvable:$true] %s13
      %19 = dma.hbm_to_vmem [thread:$0]  %s0, 256, %s14, [#allocation3], 128, 128, 8
    $region5: #{tpu_custom_call.1} parent=1 // pred_fallthru
      _
    // Predicated region
    $region6: #{tpu_custom_call.1} parent=1 // pred_check
      _
    $region7: #{tpu_custom_call.1} parent=1 // pred_check_branch
      %21 = sbr.rel (0) target = $region9
    $region8: #{tpu_custom_call.1} parent=1 // pred_region
      %22 = dma.done [#allocation3], 256
    $region9: #{tpu_custom_call.1} parent=1 // pred_fallthru
      _
    %v23 = vld [vmem:[#allocation2] sm:$0xff]
    %v24 = vld [vmem:[#allocation2 + $0x8] sm:$0xff]
    %v25 = vadd.f32 %v23, 3.0
    %v26 = vadd.f32 %v24, 3.0
    %v27 = vmax.f32 %v25, 0.0
    %v28 = vmax.f32 %v26, 0.0
    %v29 = vmin.f32 %v27, 6.0
    %v30 = vmin.f32 %v28, 6.0
    %v31 = vmul.f32 %v23, %v29
    %v32 = vmul.f32 %v24, %v30
    %v33 = vmul.f32 %v31, 0.16666667
    %v34 = vmul.f32 %v32, 0.16666667
    %35 = vst [vmem:[#allocation5] sm:$0xff] %v33
    %36 = vst [vmem:[#allocation5 + $0x8] sm:$0xff] %v34
    // Predicated region
    $region10: #{tpu_custom_call.1} parent=1 // pred_check
      _
    $region11: #{tpu_custom_call.1} parent=1 // pred_check_branch
      %38 = sbr.rel (0) target = $region13
    $region12: #{tpu_custom_call.1} parent=1 // pred_region
      %s40 = ssub.s32 256, 256
      %41 = vsyncadd [#allocation4], %s40
      %s42 = sshll.u32 [#allocation5], 4
      %s43 = int_to_ptr.vmem [resolvable:$true] %s42
      %48 = dma.vmem_to_hbm [thread:$0]  %s43, 256, %s1, [#allocation4], 128, 128, 8
    $region13: #{tpu_custom_call.1} parent=1 // pred_fallthru
      _
    // Predicated region
    $region14: #{tpu_custom_call.1} parent=1 // pred_check
      _
    $region15: #{tpu_custom_call.1} parent=1 // pred_check_branch
      %50 = sbr.rel (0) target = $region17
    $region16: #{tpu_custom_call.1} parent=1 // pred_region
      %51 = dma.done [#allocation4], 256
    $region17: #{tpu_custom_call.1} parent=1 // pred_fallthru
      _
    %52 = vsyncpa [#allocation3], 1
    %53 = vsyncpa [#allocation4], 1

</llo_original>
